<compile_context>
chip_gen: v7x
topology: tpu7x:2x2x1
jax: 0.10.0
libtpu: 0.0.40
codegen_flags: <defaults>
</compile_context>

<pallas_src>
import functools

import jax
import jax.numpy as jnp
from jax.experimental import pallas as pl
from jax.experimental.pallas import tpu as pltpu


def _round_up(x, m):
    return (x + m - 1) // m * m


def _tagging_fnn_decoder_kernel(h_ref, w_ref, b_ref, meta_ref,
                                prob_ref, partial_ref, *, num_tags, pad_id):
    # h_ref:      (TN, D)      f32    current token tile (cast to bf16 in-vreg for MXU)
    # w_ref:      (D, C_pad)   bf16   resident weights (pre-transposed, zero-padded cols)
    # b_ref:      (1, C_pad)   f32    bias, -1e30 for padded classes
    # meta_ref:   (TN, 2)      i32    col 0 = mask (1 real / 0 pad), col 1 = label
    # prob_ref:   (TN, C)      f32    softmax over the real num_tags classes
    # partial_ref:(1, 8, 128)  f32    [0,0,0] = per-tile loss sum, [0,1,0] = valid count
    h = h_ref[...].astype(jnp.bfloat16)           # cast in-kernel: HBM stream read once as f32
    w = w_ref[...]
    b = b_ref[...]

    # logits = h @ w + b  (MXU, f32 accumulation); weight already in (D, C_pad) layout.
    logits = jnp.dot(h, w, preferred_element_type=jnp.float32) + b     # (TN, C_pad) f32

    tn, c_pad = logits.shape
    col = jax.lax.broadcasted_iota(jnp.int32, (tn, c_pad), 1)

    mask = meta_ref[:, 0:1]                       # (TN, 1) i32
    labels = meta_ref[:, 1:2]                     # (TN, 1) i32

    # Masked (padding) tokens: real classes -> 0 logit (uniform softmax over num_tags,
    # matching the reference's "+ -1e32" trick); padded classes stay at -1e30.
    neutral = jnp.where(col < num_tags, jnp.float32(0.0), jnp.float32(-1e30))
    logits = jnp.where(mask > 0, logits, neutral)

    # Numerically stable softmax over the padded class axis; padded classes contribute
    # exp(-huge) == 0 to denom, so normalization matches softmax over the real classes.
    row_max = jnp.max(logits, axis=-1, keepdims=True)
    shifted = logits - row_max
    e = jnp.exp(shifted)
    denom = jnp.sum(e, axis=-1, keepdims=True)
    prob_full = e / denom                         # exact divide (mem-bound: cost hidden)
    prob_ref[...] = prob_full[:, :num_tags]       # store only the real classes (TN, C)

    # Cross-entropy with ignore_index=pad_id, without materializing full log_softmax:
    # pick the shifted logit first, subtract log(denom) on the (TN, 1) column.
    picked_shift = jnp.sum(jnp.where(col == labels, shifted, jnp.float32(0.0)),
                           axis=-1, keepdims=True)             # (TN, 1)
    picked_logp = picked_shift - jnp.log(denom)                 # (TN, 1)
    valid = (labels != pad_id).astype(jnp.float32)              # (TN, 1)
    loss_sum = jnp.sum(-picked_logp * valid)
    count = jnp.sum(valid)

    sub = jax.lax.broadcasted_iota(jnp.int32, (8, 128), 0)
    tile = jnp.where(sub == 0, loss_sum, jnp.float32(0.0))
    tile = jnp.where(sub == 1, count, tile)
    partial_ref[0] = tile


def tagging_fnn_decoder(hiddens, mask, labels, weight, bias, *, pad_id, tile_n=1024):
    """Forward pass of TaggingFNNDecoder as a single tiled Pallas TPU kernel.

    hiddens: (B, T, D) f32 ; mask: (B, T) {0,1} ; labels: (B, T) int
    weight:  (C, D) f32 (PyTorch nn.Linear layout) ; bias: (C,) f32
    Returns (prob (B, T, C) f32, loss scalar f32).
    """
    B, T, D = hiddens.shape
    C = weight.shape[0]
    N = B * T

    # MXU/vreg-friendly class width for in-kernel compute only; the prob output is
    # written at the true width C.
    C_pad = _round_up(max(C, 128), 128)

    # Token tile: large (amortizes ~0.35 us/step grid overhead, DMA ramp, weight pushes),
    # multiple of 16, but capped so the grid has >= 2 steps whenever there is enough work
    # (so v7x megacore can give both TensorCores a share of the single parallel axis).
    TN = min(tile_n, max(16, _round_up(pl.cdiv(N, 2), 16)))
    N_pad = _round_up(N, TN)
    G = N_pad // TN

    # --- wrapper-side packing / padding (cheap XLA ops) ---
    h2 = hiddens.reshape(N, D).astype(jnp.float32)             # stays f32; cast in-kernel
    mask_i = mask.reshape(N, 1).astype(jnp.int32)
    lab_i = labels.reshape(N, 1).astype(jnp.int32)
    if N_pad != N:
        pad = N_pad - N
        h2 = jnp.pad(h2, ((0, pad), (0, 0)))
        mask_i = jnp.pad(mask_i, ((0, pad), (0, 0)))                         # mask = 0
        lab_i = jnp.pad(lab_i, ((0, pad), (0, 0)), constant_values=pad_id)   # ignored
    meta = jnp.concatenate([mask_i, lab_i], axis=1)                          # (N_pad, 2)

    # Weight pre-transposed once to (D, C_pad) bf16 so the kernel's dot never needs an
    # in-kernel transpose; padded classes get zero weights and a -1e30 bias.
    w2 = jnp.zeros((D, C_pad), jnp.float32).at[:, :C].set(
        weight.astype(jnp.float32).T).astype(jnp.bfloat16)
    b2 = jnp.full((1, C_pad), -1e30, jnp.float32).at[:, :C].set(
        bias.reshape(1, C).astype(jnp.float32))

    kernel = functools.partial(_tagging_fnn_decoder_kernel, num_tags=C, pad_id=pad_id)

    # Right-sized scoped-VMEM request: double-buffered streamed tiles + resident weight/
    # bias + a handful of (TN, C_pad) f32 compiler temps, with a modest floor/headroom,
    # capped well under v7x's 64 MiB physical VMEM.
    per_tile = TN * D * 4 + TN * 2 * 4 + TN * C * 4 + 8 * 128 * 4
    resident = D * C_pad * 2 + C_pad * 4
    temps = 6 * TN * C_pad * 4
    vmem_limit = int(min(max(2 * (per_tile + resident) + temps, 12 << 20), 48 << 20))

    prob_pad, partials = pl.pallas_call(
        kernel,
        out_shape=(
            jax.ShapeDtypeStruct((N_pad, C), jnp.float32),
            jax.ShapeDtypeStruct((G, 8, 128), jnp.float32),
        ),
        grid_spec=pltpu.PrefetchScalarGridSpec(
            num_scalar_prefetch=0,
            grid=(G,),
            in_specs=[
                pl.BlockSpec((TN, D), lambda i: (i, 0)),           # hiddens tile (f32)
                pl.BlockSpec((D, C_pad), lambda i: (0, 0)),        # weight (resident)
                pl.BlockSpec((1, C_pad), lambda i: (0, 0)),        # bias (resident)
                pl.BlockSpec((TN, 2), lambda i: (i, 0)),           # fused mask+labels
            ],
            out_specs=(
                pl.BlockSpec((TN, C), lambda i: (i, 0)),           # prob tile, true width
                pl.BlockSpec((1, 8, 128), lambda i: (i, 0, 0)),    # per-tile loss partials
            ),
        ),
        compiler_params=pltpu.CompilerParams(
            dimension_semantics=("parallel",),   # no cross-tile state -> megacore-shardable
            vmem_limit_bytes=vmem_limit,
        ),
    )(h2, w2, b2, meta)

    prob = (prob_pad[:N] if N_pad != N else prob_pad).reshape(B, T, C)
    loss_sum = jnp.sum(partials[:, 0, 0])
    count = jnp.sum(partials[:, 1, 0])
    # Guard 0/0 when every token is ignored (PyTorch would return NaN here).
    loss = jnp.where(count > 0, loss_sum / jnp.maximum(count, 1.0), 0.0)
    return prob, loss


if __name__ == "__main__":
    # Small shapes consistent with the module: batch=2, seq=8, hidden=32, num_tags=10.
    B, T, D, C = 2, 8, 32, 10
    pad_id = 0

    key = jax.random.PRNGKey(0)
    k_h, k_w, k_b, k_lab = jax.random.split(key, 4)

    hiddens = jax.random.normal(k_h, (B, T, D), dtype=jnp.float32)
    # mask: first 6 tokens valid in row 0, first 5 in row 1
    lengths = jnp.array([6, 5], dtype=jnp.int32)
    mask = (jnp.arange(T)[None, :] < lengths[:, None]).astype(jnp.float32)   # (B, T)
    # labels in [1, C) for valid tokens, pad_id elsewhere
    labels = jax.random.randint(k_lab, (B, T), 1, C, dtype=jnp.int32)
    labels = jnp.where(mask > 0, labels, pad_id).astype(jnp.int32)

    # Deterministic parameters (shapes from nn.Linear(input_size, num_tags)).
    weight = 0.1 * jax.random.normal(k_w, (C, D), dtype=jnp.float32)   # (num_tags, input_size)
    bias = 0.1 * jax.random.normal(k_b, (C,), dtype=jnp.float32)

    prob, loss = tagging_fnn_decoder(hiddens, mask, labels, weight, bias, pad_id=pad_id)
    jax.block_until_ready((prob, loss))

    assert prob.shape == (B, T, C)
    assert loss.shape == ()
    assert bool(jnp.isfinite(loss))
    # softmax rows sum to 1 (exact divide in-kernel)
    assert jnp.allclose(jnp.sum(prob, axis=-1), 1.0, atol=1e-3)

    # Pure-JAX f32 reference (mirrors the PyTorch module); loose tolerance for bf16 matmul.
    h_flat = hiddens.reshape(-1, D)
    logits_ref = h_flat @ weight.T + bias
    logits_ref = logits_ref + (1.0 - mask.reshape(-1, 1)) * jnp.float32(-1e32)
    prob_ref = jax.nn.softmax(logits_ref, axis=-1).reshape(B, T, C)
    lsm = jax.nn.log_softmax(logits_ref, axis=-1)
    lab_flat = labels.reshape(-1)
    valid = lab_flat != pad_id
    nll = -jnp.take_along_axis(lsm, lab_flat[:, None], axis=1)[:, 0]
    loss_ref = jnp.sum(jnp.where(valid, nll, 0.0)) / jnp.maximum(jnp.sum(valid), 1)

    assert jnp.allclose(prob, prob_ref, atol=3e-2)
    assert jnp.allclose(loss, loss_ref, rtol=3e-2, atol=3e-2)

    print("KERNEL_OK")
</pallas_src>

<mosaic_0001>
module attributes {stable_mosaic.version = 11 : i64} {
  func.func @_tagging_fnn_decoder_kernel(%arg0: i32, %arg1: memref<16x32xf32, #tpu.memory_space<vmem>>, %arg2: memref<32x128xbf16, #tpu.memory_space<vmem>>, %arg3: memref<1x128xf32, #tpu.memory_space<vmem>>, %arg4: memref<16x2xi32, #tpu.memory_space<vmem>>, %arg5: memref<16x10xf32, #tpu.memory_space<vmem>>, %arg6: memref<1x8x128xf32, #tpu.memory_space<vmem>>) attributes {dimension_semantics = [#tpu.dimension_semantics<parallel>], iteration_bounds = array<i64: 1>, scalar_prefetch = 0 : i64, scratch_operands = 0 : i64, tpu.core_type = #tpu.core_type<tc>, window_params = [{transform_indices = @transform_0, window_bounds = array<i64: 16, 32>}, {pipeline_mode = #tpu.pipeline_mode<synchronous>, transform_indices = @transform_1, window_bounds = array<i64: 32, 128>}, {pipeline_mode = #tpu.pipeline_mode<synchronous>, transform_indices = @transform_2, window_bounds = array<i64: 1, 128>}, {transform_indices = @transform_3, window_bounds = array<i64: 16, 2>}, {transform_indices = @transform_4, window_bounds = array<i64: 16, 10>}, {transform_indices = @transform_5, window_bounds = array<i64: 1, 8, 128>}]} {
    %c0 = arith.constant 0 : index
    %c0_0 = arith.constant 0 : index
    %0 = vector.load %arg1[%c0, %c0_0] : memref<16x32xf32, #tpu.memory_space<vmem>>, vector<16x32xf32>
    %1 = arith.truncf %0 : vector<16x32xf32> to vector<16x32xbf16>
    %c0_1 = arith.constant 0 : index
    %c0_2 = arith.constant 0 : index
    %2 = vector.load %arg2[%c0_1, %c0_2] : memref<32x128xbf16, #tpu.memory_space<vmem>>, vector<32x128xbf16>
    %c0_3 = arith.constant 0 : index
    %c0_4 = arith.constant 0 : index
    %3 = vector.load %arg3[%c0_3, %c0_4] : memref<1x128xf32, #tpu.memory_space<vmem>>, vector<1x128xf32>
    %cst = arith.constant dense<0.000000e+00> : vector<16x128xf32>
    %4 = tpu.matmul %1, %2, %cst {dimension_numbers = #tpu.dot_dimension_numbers<[1], [0], [0], [1], [0, 0, 1, 1], [], []>} : vector<16x32xbf16>, vector<32x128xbf16>, vector<16x128xf32> -> vector<16x128xf32>
    %5 = vector.broadcast %3 : vector<1x128xf32> to vector<16x128xf32>
    %6 = arith.addf %4, %5 : vector<16x128xf32>
    %7 = tpu.iota {dimensions = array<i32: 1>} : vector<16x128xi32>
    %c0_5 = arith.constant 0 : index
    %c0_6 = arith.constant 0 : index
    %8 = vector.load %arg4[%c0_5, %c0_6] : memref<16x2xi32, #tpu.memory_space<vmem>>, vector<16x1xi32>
    %c0_7 = arith.constant 0 : index
    %c1 = arith.constant 1 : index
    %9 = vector.load %arg4[%c0_7, %c1] : memref<16x2xi32, #tpu.memory_space<vmem>>, vector<16x1xi32>
    %c10_i32 = arith.constant 10 : i32
    %10 = vector.broadcast %c10_i32 : i32 to vector<16x128xi32>
    %11 = arith.cmpi slt, %7, %10 : vector<16x128xi32>
    %cst_8 = arith.constant 0.000000e+00 : f32
    %cst_9 = arith.constant -1.000000e+30 : f32
    %12 = vector.broadcast %cst_8 : f32 to vector<16x128xf32>
    %13 = vector.broadcast %cst_9 : f32 to vector<16x128xf32>
    %14 = arith.select %11, %12, %13 : vector<16x128xi1>, vector<16x128xf32>
    %c0_i32 = arith.constant 0 : i32
    %15 = vector.broadcast %c0_i32 : i32 to vector<16x1xi32>
    %16 = arith.cmpi sgt, %8, %15 : vector<16x1xi32>
    %17 = vector.shape_cast %16 : vector<16x1xi1> to vector<16x1xi1>
    %18 = vector.broadcast %17 : vector<16x1xi1> to vector<16x128xi1>
    %19 = arith.select %18, %6, %14 : vector<16x128xi1>, vector<16x128xf32>
    %cst_10 = arith.constant dense<0xFF800000> : vector<16xf32>
    %20 = vector.multi_reduction <maximumf>, %19, %cst_10 [1] : vector<16x128xf32> to vector<16xf32>
    %21 = vector.shape_cast %20 : vector<16xf32> to vector<16x1xf32>
    %22 = vector.broadcast %21 : vector<16x1xf32> to vector<16x128xf32>
    %23 = arith.subf %19, %22 : vector<16x128xf32>
    %24 = math.exp %23 : vector<16x128xf32>
    %cst_11 = arith.constant dense<0.000000e+00> : vector<16xf32>
    %25 = vector.multi_reduction <add>, %24, %cst_11 [1] : vector<16x128xf32> to vector<16xf32>
    %26 = vector.shape_cast %25 : vector<16xf32> to vector<16x1xf32>
    %27 = vector.broadcast %26 : vector<16x1xf32> to vector<16x128xf32>
    %28 = arith.divf %24, %27 : vector<16x128xf32>
    %29 = vector.extract_strided_slice %28 {offsets = [0, 0], sizes = [16, 10], strides = [1, 1]} : vector<16x128xf32> to vector<16x10xf32>
    %c0_12 = arith.constant 0 : index
    %c0_13 = arith.constant 0 : index
    %30 = vector.load %arg5[%c0_12, %c0_13] : memref<16x10xf32, #tpu.memory_space<vmem>>, vector<16x10xf32>
    tpu.vector_store %arg5[%c0_12, %c0_13], %29 {strides = array<i32>} : memref<16x10xf32, #tpu.memory_space<vmem>>, vector<16x10xf32>,
    %31 = vector.broadcast %9 : vector<16x1xi32> to vector<16x128xi32>
    %32 = arith.cmpi eq, %7, %31 : vector<16x128xi32>
    %cst_14 = arith.constant 0.000000e+00 : f32
    %33 = vector.broadcast %cst_14 : f32 to vector<16x128xf32>
    %34 = arith.select %32, %23, %33 : vector<16x128xi1>, vector<16x128xf32>
    %cst_15 = arith.constant dense<0.000000e+00> : vector<16xf32>
    %35 = vector.multi_reduction <add>, %34, %cst_15 [1] : vector<16x128xf32> to vector<16xf32>
    %36 = vector.shape_cast %35 : vector<16xf32> to vector<16x1xf32>
    %37 = math.log %26 : vector<16x1xf32>
    %38 = arith.subf %36, %37 : vector<16x1xf32>
    %c0_i32_16 = arith.constant 0 : i32
    %39 = vector.broadcast %c0_i32_16 : i32 to vector<16x1xi32>
    %40 = arith.cmpi ne, %9, %39 : vector<16x1xi32>
    %41 = arith.extui %40 : vector<16x1xi1> to vector<16x1xi32>
    %42 = arith.sitofp %41 : vector<16x1xi32> to vector<16x1xf32>
    %cst_17 = arith.constant 0.000000e+00 : f32
    %43 = vector.broadcast %cst_17 : f32 to vector<16x1xf32>
    %44 = arith.subf %43, %38 : vector<16x1xf32>
    %45 = arith.mulf %44, %42 : vector<16x1xf32>
    %46 = vector.shape_cast %45 : vector<16x1xf32> to vector<1x16x1xf32>
    %cst_18 = arith.constant dense<0.000000e+00> : vector<1xf32>
    %47 = vector.multi_reduction <add>, %46, %cst_18 [1, 2] : vector<1x16x1xf32> to vector<1xf32>
    %48 = vector.shape_cast %47 : vector<1xf32> to vector<1x1x1xf32>
    %49 = vector.extract %48[0, 0, 0] : f32 from vector<1x1x1xf32>
    %50 = vector.shape_cast %42 : vector<16x1xf32> to vector<1x16x1xf32>
    %cst_19 = arith.constant dense<0.000000e+00> : vector<1xf32>
    %51 = vector.multi_reduction <add>, %50, %cst_19 [1, 2] : vector<1x16x1xf32> to vector<1xf32>
    %52 = vector.shape_cast %51 : vector<1xf32> to vector<1x1x1xf32>
    %53 = vector.extract %52[0, 0, 0] : f32 from vector<1x1x1xf32>
    %54 = tpu.iota {dimensions = array<i32: 0>} : vector<8x128xi32>
    %c0_i32_20 = arith.constant 0 : i32
    %55 = vector.broadcast %c0_i32_20 : i32 to vector<8x128xi32>
    %56 = arith.cmpi eq, %54, %55 : vector<8x128xi32>
    %cst_21 = arith.constant 0.000000e+00 : f32
    %57 = vector.broadcast %49 : f32 to vector<8x128xf32>
    %58 = vector.broadcast %cst_21 : f32 to vector<8x128xf32>
    %59 = arith.select %56, %57, %58 : vector<8x128xi1>, vector<8x128xf32>
    %c1_i32 = arith.constant 1 : i32
    %60 = vector.broadcast %c1_i32 : i32 to vector<8x128xi32>
    %61 = arith.cmpi eq, %54, %60 : vector<8x128xi32>
    %62 = vector.broadcast %53 : f32 to vector<8x128xf32>
    %63 = arith.select %61, %62, %59 : vector<8x128xi1>, vector<8x128xf32>
    %c0_22 = arith.constant 0 : index
    %c0_23 = arith.constant 0 : index
    %c0_24 = arith.constant 0 : index
    %64 = vector.load %arg6[%c0_22, %c0_23, %c0_24] : memref<1x8x128xf32, #tpu.memory_space<vmem>>, vector<1x8x128xf32>
    %65 = vector.shape_cast %64 : vector<1x8x128xf32> to vector<8x128xf32>
    %66 = vector.shape_cast %63 : vector<8x128xf32> to vector<1x8x128xf32>
    tpu.vector_store %arg6[%c0_22, %c0_23, %c0_24], %66 {strides = array<i32>} : memref<1x8x128xf32, #tpu.memory_space<vmem>>, vector<1x8x128xf32>,
    return
  }
  func.func @transform_0(%arg0: i32) -> (i32, i32) {
    %c0_i32 = arith.constant 0 : i32
    %c0_i32_0 = arith.constant 0 : i32
    return %arg0, %c0_i32 : i32, i32
  }
  func.func @transform_1(%arg0: i32) -> (i32, i32) {
    %c0_i32 = arith.constant 0 : i32
    %c0_i32_0 = arith.constant 0 : i32
    %c0_i32_1 = arith.constant 0 : i32
    return %c0_i32, %c0_i32_0 : i32, i32
  }
  func.func @transform_2(%arg0: i32) -> (i32, i32) {
    %c0_i32 = arith.constant 0 : i32
    %c0_i32_0 = arith.constant 0 : i32
    %c0_i32_1 = arith.constant 0 : i32
    return %c0_i32, %c0_i32_0 : i32, i32
  }
  func.func @transform_3(%arg0: i32) -> (i32, i32) {
    %c0_i32 = arith.constant 0 : i32
    %c0_i32_0 = arith.constant 0 : i32
    return %arg0, %c0_i32 : i32, i32
  }
  func.func @transform_4(%arg0: i32) -> (i32, i32) {
    %c0_i32 = arith.constant 0 : i32
    %c0_i32_0 = arith.constant 0 : i32
    return %arg0, %c0_i32 : i32, i32
  }
  func.func @transform_5(%arg0: i32) -> (i32, i32, i32) {
    %c0_i32 = arith.constant 0 : i32
    %c0_i32_0 = arith.constant 0 : i32
    %c0_i32_1 = arith.constant 0 : i32
    return %arg0, %c0_i32, %c0_i32_0 : i32, i32, i32
  }
}

</mosaic_0001>

<llo_original>
// kernel: tpu_custom_call.1
$region0: #{tpu_custom_call.1}
  #allocation0 [shape = 'u32[]', space=smem, size = 0x4, offset = 0x4, fixed_abs, tag = 'smem constant byte address 0x4 - core index']
  #allocation1 [shape = 'u32[144,128]{1,0:T(1,128)}', space=vmem, size = 0x12000, scoped, tag = 'internal scratch']
  %s0 = inlined_call_operand.vmem [shape: f32[16,32], index: 0, kind: input, shape index: {}]
  %s1 = inlined_call_operand.hbm [shape: bf16[32,128], index: 1, kind: input, shape index: {}]
  %s2 = inlined_call_operand.vmem [shape: f32[1,128], index: 2, kind: input, shape index: {}]
  %s3 = inlined_call_operand.vmem [shape: s32[16,2], index: 3, kind: input, shape index: {}]
  %s4 = inlined_call_operand.hbm [shape: f32[16,10], index: 4, kind: output, shape index: {0}]
  %s5 = inlined_call_operand.hbm [shape: f32[1,8,128], index: 5, kind: output, shape index: {1}]
  %6 = xla_tuple %s4, %s5
  %s7 = sld [smem:[#allocation0]]
  $region38: #{tpu_custom_call.1} parent=0
    _
  %s9 = ssub.s32 1, %s7
  %s10 = scalar_select 0, %s9, %s7
  $region1: #{tpu_custom_call.1} parent=0
    #allocation2 [shape = 'u8[8192]{0}', space=vmem, size = 0x2000, scoped, tag = 'input window, operand 1, single buffered']
    #allocation3 [shape = 's32[1]{0}', space=sflag, size = 0x4, scoped, tag = 'scoped memory for tpu_custom_call.1']
    #allocation4 [shape = 's32[1]{0}', space=sflag, size = 0x4, scoped, tag = 'scoped memory for tpu_custom_call.1']
    #allocation5 [shape = 'u8[8192]{0}', space=vmem, size = 0x2000, scoped, tag = 'output window, operand 0, single buffered']
    #allocation6 [shape = 'u8[4096]{0}', space=vmem, size = 0x1000, scoped, tag = 'output window, operand 1, single buffered']
    #allocation7 [shape = 's32[1]{0}', space=sflag, size = 0x4, scoped, tag = 'scoped memory for tpu_custom_call.1']
    %11 = vsyncpa [#allocation3], 0
    %12 = vsyncpa [#allocation4], 0
    %13 = vsyncpa [#allocation7], 0
    // Predicated region
    $region2: #{tpu_custom_call.1} parent=1 // pred_check
      _
    $region3: #{tpu_custom_call.1} parent=1 // pred_check_branch
      %15 = sbr.rel (0) target = $region5
    $region4: #{tpu_custom_call.1} parent=1 // pred_region
      _
    $region5: #{tpu_custom_call.1} parent=1 // pred_fallthru
      _
    // Predicated region
    $region6: #{tpu_custom_call.1} parent=1 // pred_check
      _
    $region7: #{tpu_custom_call.1} parent=1 // pred_check_branch
      %17 = sbr.rel (0) target = $region9
    $region8: #{tpu_custom_call.1} parent=1 // pred_region
      %s19 = ssub.s32 256, 256
      %20 = vsyncadd [#allocation3], %s19
      %s21 = sshll.u32 [#allocation2], 4
      %s22 = int_to_ptr.vmem [resolvable:$true] %s21
      %27 = dma.hbm_to_vmem [thread:$0]  %s1, 256, %s22, [#allocation3], 64, 64, 4
    $region9: #{tpu_custom_call.1} parent=1 // pred_fallthru
      _
    // Predicated region
    $region10: #{tpu_custom_call.1} parent=1 // pred_check
      _
    $region11: #{tpu_custom_call.1} parent=1 // pred_check_branch
      %29 = sbr.rel (0) target = $region13
    $region12: #{tpu_custom_call.1} parent=1 // pred_region
      _
    $region13: #{tpu_custom_call.1} parent=1 // pred_fallthru
      _
    // Predicated region
    $region14: #{tpu_custom_call.1} parent=1 // pred_check
      _
    $region15: #{tpu_custom_call.1} parent=1 // pred_check_branch
      %31 = sbr.rel (0) target = $region17
    $region16: #{tpu_custom_call.1} parent=1 // pred_region
      _
    $region17: #{tpu_custom_call.1} parent=1 // pred_fallthru
      _
    // Predicated region
    $region18: #{tpu_custom_call.1} parent=1 // pred_check
      _
    $region19: #{tpu_custom_call.1} parent=1 // pred_check_branch
      %33 = sbr.rel (0) target = $region21
    $region20: #{tpu_custom_call.1} parent=1 // pred_region
      %34 = dma.done [#allocation3], 256
    $region21: #{tpu_custom_call.1} parent=1 // pred_fallthru
      _
    %v36 = vld [vmem:[%s0] sm:$0xff]
    %v37 = vld [vmem:[%s0 + $0x8] sm:$0xff]
    %v38 = vpack.c.bf16 %v37, %v36
    %v39 = vld [vmem:[#allocation2] sm:$0xf]
    %v40 = vld [vmem:[#allocation2 + $0x4] sm:$0xf]
    %v41 = vld [vmem:[#allocation2 + $0x8] sm:$0xf]
    %v42 = vld [vmem:[#allocation2 + $0xc] sm:$0xf]
    %v43 = vld [vmem:[%s2] sm:$0x1]
    %v45 = vlaneseq
    %v46 = vshrl.u32 %v45, 7
    %v47 = vsub.s32 0, %v46
    %v48 = vrot.slane %v43, %v47
    %v54 = vunpack.c.l.b16 %v39
    %v55 = vunpack.c.l.b16 %v40
    %v56 = vunpack.c.l.b16 %v41
    %v57 = vunpack.c.l.b16 %v42
    %v58 = vpack.c.b16 %v55, %v54
    %v59 = vpack.c.b16 %v57, %v56
    %vm62 = vcmask 261120
    %v64 = vsel %vm62, %v38, 0
    %66 = vmatprep.subr.bf16.mxu0 0
    %67 = vmatpush1.bf16.msra.mxu0 %v58
    %68 = vmatprep.subr.bf16.mxu0 0
    %69 = vmatpush1.bf16.msra.mxu0 %v59
    %70 = vmatprep.subr.bf16.mxu0 0
    %71 = vmatpush1.bf16.msra.mxu0 0
    %72 = vmatprep.subr.bf16.mxu0 0
    %73 = vmatpush1.bf16.msra.mxu0 0
    %74 = vmatprep.subr.bf16.mxu0 0
    %75 = vmatpush1.bf16.msra.mxu0 0
    %76 = vmatprep.subr.bf16.mxu0 0
    %77 = vmatpush1.bf16.msra.mxu0 0
    %78 = vmatprep.subr.bf16.mxu0 0
    %79 = vmatpush1.bf16.msra.mxu0 0
    %80 = vmatprep.subr.bf16.mxu0 0
    %81 = vmatpush1.bf16.msra.mxu0 0
    %82 = vmatprep.subr.bf16.mxu0 0
    %83 = vmatpush1.bf16.msra.mxu0 0
    %84 = vmatprep.subr.bf16.mxu0 0
    %85 = vmatpush1.bf16.msra.mxu0 0
    %86 = vmatprep.subr.bf16.mxu0 0
    %87 = vmatpush1.bf16.msra.mxu0 0
    %88 = vmatprep.subr.bf16.mxu0 0
    %89 = vmatpush1.bf16.msra.mxu0 0
    %90 = vmatprep.subr.bf16.mxu0 0
    %91 = vmatpush1.bf16.msra.mxu0 0
    %92 = vmatprep.subr.bf16.mxu0 0
    %93 = vmatpush1.bf16.msra.mxu0 0
    %94 = vmatprep.subr.bf16.mxu0 0
    %95 = vmatpush1.bf16.msra.mxu0 0
    %96 = vmatprep.subr.bf16.mxu0 0
    %97 = vmatpush1.bf16.msra.mxu0 0
    %98 = vmatprep.mubr.bf16.mxu0 0
    %99 = vmatmul.mubr.bf16.gmra.mrb[0].mxu0 %v64
    %v100 = vpop.f32.mrb[0].mxu0
    %v101 = vadd.f32 %v48, %v100
    %v102 = vpop.f32.mrb[0].mxu0
    %v103 = vpop.f32.mrb[0].mxu0
    %v104 = vadd.f32 %v48, %v103
    %v105 = vpop.f32.mrb[0].mxu0
    %106 = vdwg.mxu0
    %v107 = vlaneseq
    %v108 = vand.u32 %v107, 127
    %v109 = vld [vmem:[%s3] sm:$0xff]
    %v110 = vld [vmem:[%s3 + $0x8] sm:$0xff]
    %vm111 = vcmp.lt.s32.totalorder %v108, 10
    %v112 = vsel %vm111, 0.0, -1e+30
    %vm113 = vcmp.gt.s32.totalorder %v109, 0
    %vm114 = vcmp.gt.s32.totalorder %v110, 0
    %v115 = vsel %vm113, 1, 0
    %v116 = vsel %vm114, 1, 0
    %117 = vset.pattern.permute.xlu0 0
    %118 = vperm.xlu0 %117, %v115
    %v119 = vpop.permute.xlu0 %118
    %120 = vset.pattern.permute.xlu0 0
    %121 = vperm.xlu0 %120, %v116
    %v122 = vpop.permute.xlu0 %121
    %vm123 = vcmp.eq.s32.totalorder %v119, 1
    %vm124 = vcmp.eq.s32.totalorder %v122, 1
    %v125 = vsel %vm123, %v101, %v112
    %v126 = vsel %vm124, %v104, %v112
    %127 = vmax.xlane.f32.xlu0 %v125
    %v128 = vpop.xlane.xlu0 %127
    %129 = vmax.xlane.f32.xlu0 %v126
    %v130 = vpop.xlane.xlu0 %129
    %v131 = vsub.f32 %v125, %v128
    %v132 = vsub.f32 %v126, %v130
    %v133 = vmul.f32 %v131, 1.442695
    %v134 = vpow.pop %v133
    %v135 = vmul.f32 %v132, 1.442695
    %v136 = vpow.pop %v135
    %137 = vadd.xlane.f32.xlu0 %v134
    %v138 = vpop.xlane.xlu0 %137
    %139 = vadd.xlane.f32.xlu0 %v136
    %v140 = vpop.xlane.xlu0 %139
    %v141 = vrcp.pop %v138
    %v142 = vmul.f32 %v134, %v141
    %v143 = vrcp.pop %v140
    %v144 = vmul.f32 %v136, %v143
    %vm145 = vcmask 80896
    %146 = vst.msk [vmem:[#allocation5] sm:$0xff] %vm145, %v142
    %147 = vst.msk [vmem:[#allocation5 + $0x8] sm:$0xff] %vm145, %v144
    %148 = vset.pattern.permute.xlu0 1
    %149 = vperm.xlu0 %148, %v109
    %v150 = vpop.permute.xlu0 %149
    %151 = vset.pattern.permute.xlu0 1
    %152 = vperm.xlu0 %151, %v110
    %v153 = vpop.permute.xlu0 %152
    %vm154 = vcmp.eq.s32.totalorder %v108, %v150
    %vm155 = vcmp.eq.s32.totalorder %v108, %v153
    %v156 = vsel %vm154, %v131, 0.0
    %v157 = vsel %vm155, %v132, 0.0
    %158 = vadd.xlane.f32.xlu0 %v156
    %v159 = vpop.xlane.xlu0 %158
    %160 = vadd.xlane.f32.xlu0 %v157
    %v161 = vpop.xlane.xlu0 %160
    %v162 = vlog2.pop %v138
    %v163 = vmul.f32 %v162, 0.6931472
    %v164 = vlog2.pop %v140
    %v165 = vmul.f32 %v164, 0.6931472
    %v166 = vsub.f32 %v159, %v163
    %v167 = vsub.f32 %v161, %v165
    %vm168 = vcmp.ne.s32.totalorder %v109, 0
    %vm169 = vcmp.ne.s32.totalorder %v110, 0
    %v170 = vsel %vm168, 1, 0
    %v171 = vsel %vm169, 1, 0
    %v172 = vcvt.s32.f32 %v170
    %v173 = vcvt.s32.f32 %v171
    %v174 = vsub.f32 0.0, %v166
    %v175 = vsub.f32 0.0, %v167
    %v176 = vmul.f32 %v174, %v172
    %v177 = vmul.f32 %v175, %v173
    %180 = vrot.lane.b32.xlu0 %v176, 127
    %v181 = vpop.permute.xlu0 %180
    %182 = vrot.lane.b32.xlu0 %v177, 127
    %v183 = vpop.permute.xlu0 %182
    %vm186 = vcmask 7168
    %v187 = vsel %vm186, %v181, 0.0
    %v188 = vsel %vm186, %v183, 0.0
    %v189 = vadd.f32 %v187, %v188
    %190 = vadd.xlane.f32.xlu0 %v189
    %v191 = vpop.xlane.xlu0 %190
    %v192 = vrot.slane %v191, 4
    %v193 = vadd.f32 %v191, %v192
    %v194 = vrot.slane %v193, 2
    %v195 = vadd.f32 %v193, %v194
    %v196 = vrot.slane %v195, 1
    %v197 = vadd.f32 %v195, %v196
    %s198 = vtos %v197
    %201 = vrot.lane.b32.xlu0 %v172, 127
    %v202 = vpop.permute.xlu0 %201
    %203 = vrot.lane.b32.xlu0 %v173, 127
    %v204 = vpop.permute.xlu0 %203
    %v207 = vsel %vm186, %v202, 0.0
    %v208 = vsel %vm186, %v204, 0.0
    %v209 = vadd.f32 %v207, %v208
    %210 = vadd.xlane.f32.xlu0 %v209
    %v211 = vpop.xlane.xlu0 %210
    %v212 = vrot.slane %v211, 4
    %v213 = vadd.f32 %v211, %v212
    %v214 = vrot.slane %v213, 2
    %v215 = vadd.f32 %v213, %v214
    %v216 = vrot.slane %v215, 1
    %v217 = vadd.f32 %v215, %v216
    %s218 = vtos %v217
    %v219 = vlaneseq
    %v220 = vshrl.u32 %v219, 7
    %vm221 = vcmp.eq.s32.totalorder %v220, 0
    %v222 = vstv %s198
    %v223 = vsel %vm221, %v222, 0.0
    %vm224 = vcmp.eq.s32.totalorder %v220, 1
    %v225 = vstv %s218
    %v226 = vsel %vm224, %v225, %v223
    %227 = vst [vmem:[#allocation6] sm:$0xff] %v226
    // Predicated region
    $region22: #{tpu_custom_call.1} parent=1 // pred_check
      _
    $region23: #{tpu_custom_call.1} parent=1 // pred_check_branch
      %229 = sbr.rel (0) target = $region25
    $region24: #{tpu_custom_call.1} parent=1 // pred_region
      %s231 = ssub.s32 256, 256
      %232 = vsyncadd [#allocation4], %s231
      %s233 = sshll.u32 [#allocation5], 4
      %s234 = int_to_ptr.vmem [resolvable:$true] %s233
      %239 = dma.vmem_to_hbm [thread:$0]  %s234, 256, %s4, [#allocation4], 128, 128, 8
    $region25: #{tpu_custom_call.1} parent=1 // pred_fallthru
      _
    // Predicated region
    $region26: #{tpu_custom_call.1} parent=1 // pred_check
      _
    $region27: #{tpu_custom_call.1} parent=1 // pred_check_branch
      %241 = sbr.rel (0) target = $region29
    $region28: #{tpu_custom_call.1} parent=1 // pred_region
      %s243 = ssub.s32 128, 128
      %244 = vsyncadd [#allocation7], %s243
      %s246 = sshll.u32 [#allocation6], 4
      %s247 = int_to_ptr.vmem [resolvable:$true] %s246
      %249 = dma.vmem_to_hbm [thread:$0]  %s247, 128, %s5, [#allocation7]
    $region29: #{tpu_custom_call.1} parent=1 // pred_fallthru
      _
    // Predicated region
    $region30: #{tpu_custom_call.1} parent=1 // pred_check
      _
    $region31: #{tpu_custom_call.1} parent=1 // pred_check_branch
      %251 = sbr.rel (0) target = $region33
    $region32: #{tpu_custom_call.1} parent=1 // pred_region
      %252 = dma.done [#allocation4], 256
    $region33: #{tpu_custom_call.1} parent=1 // pred_fallthru
      _
    // Predicated region
    $region34: #{tpu_custom_call.1} parent=1 // pred_check
      _
    $region35: #{tpu_custom_call.1} parent=1 // pred_check_branch
      %254 = sbr.rel (0) target = $region37
    $region36: #{tpu_custom_call.1} parent=1 // pred_region
      %255 = dma.done [#allocation7], 128
    $region37: #{tpu_custom_call.1} parent=1 // pred_fallthru
      _
    %256 = vsyncpa [#allocation3], 1
    %257 = vsyncpa [#allocation4], 1
    %258 = vsyncpa [#allocation7], 1

</llo_original>
